<compile_context>
chip_gen: v7x
topology: tpu7x:2x2x1
jax: 0.10.0
libtpu: 0.0.40
codegen_flags: <defaults>
</compile_context>

<pallas_src>
import functools
import math

import jax
import jax.numpy as jnp
from jax.experimental import pallas as pl
from jax.experimental.pallas import tpu as pltpu


# ---------------------------------------------------------------------------
# In-kernel helpers
# ---------------------------------------------------------------------------

def _channel_attention(m, w_ref, k: int, C: int):
    """sigmoid(Conv1d(1, 1, k, pad=(k-1)//2, bias=False) across channels).

    m:     (bt, C, 1) f32 pooled means, channels on sublanes.
    w_ref: SMEM (k,) f32 conv taps.
    Returns (bt, C, 1) f32 attention weights.
    """
    pad = (k - 1) // 2
    ch = jax.lax.broadcasted_iota(jnp.int32, m.shape, dimension=1)
    y = w_ref[pad] * m                                   # center tap (k is odd)
    for j in range(k):
        off = j - pad
        if off == 0:
            continue
        # tap[b, c, 0] = m[b, (c + off) % C, 0]; mask wrapped-around edge taps
        # so this matches the zero-padded Conv1d.  Sublane roll -> XLU slot.
        tap = pltpu.roll(m, shift=(-off) % C, axis=1)
        valid = jnp.logical_and(ch + off >= 0, ch + off < C)
        y = y + w_ref[j] * jnp.where(valid, tap, 0.0)
    return jax.nn.sigmoid(y)


def _eca_fused_kernel(k: int, C: int, w_ref, x_ref, o_ref):
    """Single-pass kernel: full (bt, C, L) slab resident, 1 read + 1 write of x."""
    # Pool over L (lanes).  keepdims keeps channels on sublanes so the conv is
    # a sublane roll and the final scale is a plain lane broadcast (no
    # lane<->sublane relayouts on the side path).  The f32 cast is written so
    # it can fuse into the reduction instead of materializing an f32 slab.
    m = jnp.mean(x_ref[...].astype(jnp.float32), axis=-1, keepdims=True)  # (bt,C,1)
    a = _channel_attention(m, w_ref, k, C).astype(o_ref.dtype)            # (bt,C,1)
    # Re-read x_ref for the scale (keeps vreg/VMEM pressure low) and apply it
    # in the input dtype.
    o_ref[...] = x_ref[...] * a


def _pool_kernel(inv_L: float, x_ref, mean_ref):
    """Fallback pass 1: accumulate per-(b, c) means over L tiles."""
    li = pl.program_id(1)

    @pl.when(li == 0)
    def _():
        mean_ref[...] = jnp.zeros_like(mean_ref)

    mean_ref[...] += jnp.sum(x_ref[...].astype(jnp.float32), axis=-1, keepdims=True)

    @pl.when(li == pl.num_programs(1) - 1)
    def _():
        mean_ref[...] *= inv_L


def _scale_kernel(k: int, C: int, w_ref, mean_ref, x_ref, o_ref):
    """Fallback pass 2: tiny conv+sigmoid (recomputed per tile) + broadcast scale."""
    a = _channel_attention(mean_ref[...], w_ref, k, C).astype(o_ref.dtype)
    o_ref[...] = x_ref[...] * a


# ---------------------------------------------------------------------------
# Wrapper-side tiling helpers
# ---------------------------------------------------------------------------

def _vmem_cap_bytes(headroom: int = 8 << 20, fallback: int = 48 << 20) -> int:
    """Physical VMEM minus headroom (v5e/v6e 128 MiB, v7x 64 MiB)."""
    try:
        cap = int(pltpu.get_tpu_info().vmem_capacity_bytes) - headroom
        return max(cap, 16 << 20)
    except Exception:
        return fallback


def _pick_batch_tile(B: int, per_batch_bytes: int, budget_bytes: int,
                     min_steps: int = 6) -> int:
    """Largest divisor of B whose tile fits `budget_bytes`, keeping at least
    `min_steps` grid steps when B allows it (pipelining + v7x 2-TC sharding)."""
    bt = max(1, budget_bytes // max(per_batch_bytes, 1))
    bt = min(bt, B)
    if B >= min_steps:
        bt = min(bt, max(1, B // min_steps))
    else:
        bt = 1          # small B: one batch per step so both TensorCores get work
    while B % bt:
        bt -= 1
    return bt


def _pick_len_tile(L: int, C: int, itemsize: int, budget_bytes: int) -> int:
    """Largest multiple-of-128 divisor of L whose (1, C, lt) tile fits budget."""
    best = 128
    lt = 128
    while lt <= L:
        if L % lt == 0 and C * lt * itemsize <= budget_bytes:
            best = lt
        lt += 128
    return best


# ---------------------------------------------------------------------------
# Public entry point
# ---------------------------------------------------------------------------

def eca_layer(x: jax.Array, weight: jax.Array, k: int,
              *, tile_budget_bytes: int = 4 << 20) -> jax.Array:
    """ECA forward. x: (B, C, L); weight: Conv1d(1,1,k) taps (any shape with k elems)."""
    B, C, L = x.shape
    itemsize = x.dtype.itemsize
    per_batch = C * L * itemsize
    vmem_cap = _vmem_cap_bytes()
    weight = jnp.asarray(weight, jnp.float32).reshape(-1)

    smem_spec = pl.BlockSpec(memory_space=pltpu.MemorySpace.SMEM)
    use_fallback = (per_batch > tile_budget_bytes) and (L % 128 == 0) and (L >= 256)

    if not use_fallback:
        # ---------------- fused single-pass path ----------------
        # TODO(synk): slabs with L not divisible by 128 that still exceed VMEM
        # would need a C-halo tiling for the channel conv; not implemented.
        bt = _pick_batch_tile(B, per_batch, tile_budget_bytes)
        tile_bytes = bt * per_batch
        # in+out double-buffered + slack for f32 temporaries on the pooled path,
        # clamped to the device's physical VMEM.
        need = 4 * tile_bytes + 2 * bt * C * L * 4 + (4 << 20)
        vmem_limit = min(max(need, 32 << 20), vmem_cap)
        cost = pl.CostEstimate(flops=3 * B * C * L,
                               transcendentals=B * C,
                               bytes_accessed=2 * B * C * L * itemsize)
        return pl.pallas_call(
            functools.partial(_eca_fused_kernel, k, C),
            out_shape=jax.ShapeDtypeStruct((B, C, L), x.dtype),
            grid=(B // bt,),
            in_specs=[
                smem_spec,                                        # conv taps
                pl.BlockSpec((bt, C, L), lambda b: (b, 0, 0)),    # x slab
            ],
            out_specs=pl.BlockSpec((bt, C, L), lambda b: (b, 0, 0)),
            compiler_params=pltpu.CompilerParams(
                dimension_semantics=("parallel",),
                vmem_limit_bytes=vmem_limit,
            ),
            cost_estimate=cost,
        )(weight, x)

    # ---------------- L-tiled two-pass fallback (slab > VMEM budget) ----------------
    lt = _pick_len_tile(L, C, itemsize, tile_budget_bytes)
    bt = _pick_batch_tile(B, C * lt * itemsize, tile_budget_bytes, min_steps=1)
    tile_bytes = bt * C * lt * itemsize
    need = 4 * tile_bytes + 2 * bt * C * lt * 4 + (4 << 20)
    vmem_limit = min(max(need, 32 << 20), vmem_cap)

    # Pass 1: pooled means (B, C, 1) in f32; reduction axis (L tiles) last.
    mean = pl.pallas_call(
        functools.partial(_pool_kernel, 1.0 / float(L)),
        out_shape=jax.ShapeDtypeStruct((B, C, 1), jnp.float32),
        grid=(B // bt, L // lt),
        in_specs=[pl.BlockSpec((bt, C, lt), lambda b, l: (b, 0, l))],
        out_specs=pl.BlockSpec((bt, C, 1), lambda b, l: (b, 0, 0)),
        compiler_params=pltpu.CompilerParams(
            dimension_semantics=("parallel", "arbitrary"),
            vmem_limit_bytes=vmem_limit,
        ),
        cost_estimate=pl.CostEstimate(flops=B * C * L, transcendentals=0,
                                      bytes_accessed=B * C * L * itemsize),
    )(x)

    # Pass 2: conv + sigmoid on the tiny pooled vector (recomputed per tile),
    # then the broadcast scale of x.
    cost = pl.CostEstimate(flops=2 * B * C * L,
                           transcendentals=B * C,
                           bytes_accessed=2 * B * C * L * itemsize)
    return pl.pallas_call(
        functools.partial(_scale_kernel, k, C),
        out_shape=jax.ShapeDtypeStruct((B, C, L), x.dtype),
        grid=(B // bt, L // lt),
        in_specs=[
            smem_spec,                                            # conv taps
            pl.BlockSpec((bt, C, 1), lambda b, l: (b, 0, 0)),     # pooled means
            pl.BlockSpec((bt, C, lt), lambda b, l: (b, 0, l)),    # x tile
        ],
        out_specs=pl.BlockSpec((bt, C, lt), lambda b, l: (b, 0, l)),
        compiler_params=pltpu.CompilerParams(
            dimension_semantics=("parallel", "parallel"),
            vmem_limit_bytes=vmem_limit,
        ),
        cost_estimate=cost,
    )(weight, mean, x)


# ---------------------------------------------------------------------------
# Pure-JAX reference (matches the PyTorch forward)
# ---------------------------------------------------------------------------

def eca_reference(x: jax.Array, weight: jax.Array, k: int) -> jax.Array:
    m = jnp.mean(x.astype(jnp.float32), axis=-1)          # (B, C)
    pad = (k - 1) // 2
    mp = jnp.pad(m, ((0, 0), (pad, pad)))
    y = jnp.zeros_like(m)
    w = jnp.asarray(weight, jnp.float32).reshape(-1)
    for j in range(k):
        y = y + w[j] * mp[:, j: j + m.shape[1]]
    a = jax.nn.sigmoid(y).astype(x.dtype)[..., None]       # (B, C, 1)
    return x * a


if __name__ == "__main__":
    # Small shapes consistent with the module.  channels=16 gives k=3
    # (t = int(|log2(16) + 1| / 2) = 2, even -> k = 3).
    B, C, L = 2, 16, 8
    gamma, b_const = 2, 1
    t = int(abs((math.log(C, 2) + b_const) / gamma))
    k = t if t % 2 else t + 1

    key = jax.random.PRNGKey(0)
    kx, kw = jax.random.split(key)
    x = jax.random.normal(kx, (B, C, L), dtype=jnp.float32)
    bound = 1.0 / math.sqrt(k)                      # PyTorch Conv1d(1,1,k) init bound
    weight = jax.random.uniform(kw, (k,), jnp.float32, -bound, bound)

    # Fused single-pass path.
    out = jax.block_until_ready(eca_layer(x, weight, k))
    ref = eca_reference(x, weight, k)
    assert out.shape == x.shape and out.dtype == x.dtype
    assert jnp.allclose(out, ref, atol=1e-5, rtol=1e-5), "fused path mismatch"

    # Exercise the L-tiled two-pass fallback (forced with a tiny tile budget).
    L2 = 256
    x2 = jax.random.normal(kx, (B, C, L2), dtype=jnp.float32)
    out2 = jax.block_until_ready(eca_layer(x2, weight, k, tile_budget_bytes=8 * 1024))
    ref2 = eca_reference(x2, weight, k)
    assert jnp.allclose(out2, ref2, atol=1e-5, rtol=1e-5), "fallback path mismatch"

    print("KERNEL_OK")
</pallas_src>

<mosaic_0001>
module attributes {stable_mosaic.version = 11 : i64} {
  func.func @_eca_fused_kernel(%arg0: i32, %arg1: memref<3xf32, #tpu.memory_space<smem>>, %arg2: memref<1x16x8xf32, #tpu.memory_space<vmem>>, %arg3: memref<1x16x8xf32, #tpu.memory_space<vmem>>) attributes {dimension_semantics = [#tpu.dimension_semantics<parallel>], iteration_bounds = array<i64: 2>, scalar_prefetch = 0 : i64, scratch_operands = 0 : i64, tpu.core_type = #tpu.core_type<tc>, window_params = [{transform_indices = @transform_0, window_bounds = array<i64: 3>}, {transform_indices = @transform_1, window_bounds = array<i64: 1, 16, 8>}, {transform_indices = @transform_2, window_bounds = array<i64: 1, 16, 8>}]} {
    %c0 = arith.constant 0 : index
    %c0_0 = arith.constant 0 : index
    %c0_1 = arith.constant 0 : index
    %0 = vector.load %arg2[%c0, %c0_0, %c0_1] : memref<1x16x8xf32, #tpu.memory_space<vmem>>, vector<1x16x8xf32>
    %cst = arith.constant dense<0.000000e+00> : vector<1x16xf32>
    %1 = vector.multi_reduction <add>, %0, %cst [2] : vector<1x16x8xf32> to vector<1x16xf32>
    %2 = vector.shape_cast %1 : vector<1x16xf32> to vector<1x16x1xf32>
    %cst_2 = arith.constant 8.000000e+00 : f32
    %3 = vector.broadcast %cst_2 : f32 to vector<1x16x1xf32>
    %4 = arith.divf %2, %3 : vector<1x16x1xf32>
    %5 = tpu.iota {dimensions = array<i32: 1>} : vector<1x16x1xi32>
    %c1 = arith.constant 1 : index
    %6 = memref.load %arg1[%c1] : memref<3xf32, #tpu.memory_space<smem>>
    %7 = vector.broadcast %6 : f32 to vector<1x16x1xf32>
    %8 = arith.mulf %7, %4 : vector<1x16x1xf32>
    %c1_i32 = arith.constant 1 : i32
    %9 = tpu.dynamic_rotate %4 by %c1_i32 dim 1 : vector<1x16x1xf32>, i32 -> vector<1x16x1xf32>
    %c-1_i32 = arith.constant -1 : i32
    %10 = vector.broadcast %c-1_i32 : i32 to vector<1x16x1xi32>
    %11 = arith.addi %5, %10 : vector<1x16x1xi32>
    %c0_i32 = arith.constant 0 : i32
    %12 = vector.broadcast %c0_i32 : i32 to vector<1x16x1xi32>
    %13 = arith.cmpi sge, %11, %12 : vector<1x16x1xi32>
    %c-1_i32_3 = arith.constant -1 : i32
    %14 = vector.broadcast %c-1_i32_3 : i32 to vector<1x16x1xi32>
    %15 = arith.addi %5, %14 : vector<1x16x1xi32>
    %c16_i32 = arith.constant 16 : i32
    %16 = vector.broadcast %c16_i32 : i32 to vector<1x16x1xi32>
    %17 = arith.cmpi slt, %15, %16 : vector<1x16x1xi32>
    %18 = arith.andi %13, %17 : vector<1x16x1xi1>
    %c0_4 = arith.constant 0 : index
    %19 = memref.load %arg1[%c0_4] : memref<3xf32, #tpu.memory_space<smem>>
    %cst_5 = arith.constant 0.000000e+00 : f32
    %20 = vector.broadcast %cst_5 : f32 to vector<1x16x1xf32>
    %21 = arith.select %18, %9, %20 : vector<1x16x1xi1>, vector<1x16x1xf32>
    %22 = vector.broadcast %19 : f32 to vector<1x16x1xf32>
    %23 = arith.mulf %22, %21 : vector<1x16x1xf32>
    %24 = arith.addf %8, %23 : vector<1x16x1xf32>
    %c15_i32 = arith.constant 15 : i32
    %25 = tpu.dynamic_rotate %4 by %c15_i32 dim 1 : vector<1x16x1xf32>, i32 -> vector<1x16x1xf32>
    %c1_i32_6 = arith.constant 1 : i32
    %26 = vector.broadcast %c1_i32_6 : i32 to vector<1x16x1xi32>
    %27 = arith.addi %5, %26 : vector<1x16x1xi32>
    %c0_i32_7 = arith.constant 0 : i32
    %28 = vector.broadcast %c0_i32_7 : i32 to vector<1x16x1xi32>
    %29 = arith.cmpi sge, %27, %28 : vector<1x16x1xi32>
    %c1_i32_8 = arith.constant 1 : i32
    %30 = vector.broadcast %c1_i32_8 : i32 to vector<1x16x1xi32>
    %31 = arith.addi %5, %30 : vector<1x16x1xi32>
    %c16_i32_9 = arith.constant 16 : i32
    %32 = vector.broadcast %c16_i32_9 : i32 to vector<1x16x1xi32>
    %33 = arith.cmpi slt, %31, %32 : vector<1x16x1xi32>
    %34 = arith.andi %29, %33 : vector<1x16x1xi1>
    %c2 = arith.constant 2 : index
    %35 = memref.load %arg1[%c2] : memref<3xf32, #tpu.memory_space<smem>>
    %cst_10 = arith.constant 0.000000e+00 : f32
    %36 = vector.broadcast %cst_10 : f32 to vector<1x16x1xf32>
    %37 = arith.select %34, %25, %36 : vector<1x16x1xi1>, vector<1x16x1xf32>
    %38 = vector.broadcast %35 : f32 to vector<1x16x1xf32>
    %39 = arith.mulf %38, %37 : vector<1x16x1xf32>
    %40 = arith.addf %24, %39 : vector<1x16x1xf32>
    %41 = arith.negf %40 : vector<1x16x1xf32>
    %42 = math.exp %41 : vector<1x16x1xf32>
    %cst_11 = arith.constant 1.000000e+00 : f32
    %43 = vector.broadcast %cst_11 : f32 to vector<1x16x1xf32>
    %44 = arith.addf %43, %42 : vector<1x16x1xf32>
    %45 = arith.divf %43, %44 : vector<1x16x1xf32>
    %c0_12 = arith.constant 0 : index
    %c0_13 = arith.constant 0 : index
    %c0_14 = arith.constant 0 : index
    %46 = vector.load %arg2[%c0_12, %c0_13, %c0_14] : memref<1x16x8xf32, #tpu.memory_space<vmem>>, vector<1x16x8xf32>
    %47 = vector.broadcast %45 : vector<1x16x1xf32> to vector<1x16x8xf32>
    %48 = arith.mulf %46, %47 : vector<1x16x8xf32>
    %c0_15 = arith.constant 0 : index
    %c0_16 = arith.constant 0 : index
    %c0_17 = arith.constant 0 : index
    %49 = vector.load %arg3[%c0_15, %c0_16, %c0_17] : memref<1x16x8xf32, #tpu.memory_space<vmem>>, vector<1x16x8xf32>
    tpu.vector_store %arg3[%c0_15, %c0_16, %c0_17], %48 {strides = array<i32>} : memref<1x16x8xf32, #tpu.memory_space<vmem>>, vector<1x16x8xf32>,
    return
  }
  func.func @transform_0(%arg0: i32) -> i32 {
    %c0_i32 = arith.constant 0 : i32
    %c0_i32_0 = arith.constant 0 : i32
    return %c0_i32 : i32
  }
  func.func @transform_1(%arg0: i32) -> (i32, i32, i32) {
    %c0_i32 = arith.constant 0 : i32
    %c0_i32_0 = arith.constant 0 : i32
    %c0_i32_1 = arith.constant 0 : i32
    return %arg0, %c0_i32, %c0_i32_0 : i32, i32, i32
  }
  func.func @transform_2(%arg0: i32) -> (i32, i32, i32) {
    %c0_i32 = arith.constant 0 : i32
    %c0_i32_0 = arith.constant 0 : i32
    %c0_i32_1 = arith.constant 0 : i32
    return %arg0, %c0_i32, %c0_i32_0 : i32, i32, i32
  }
}

</mosaic_0001>

<llo_original>
// kernel: tpu_custom_call.1
$region0: #{tpu_custom_call.1}
  #allocation0 [shape = 'u32[]', space=smem, size = 0x4, offset = 0x4, fixed_abs, tag = 'smem constant byte address 0x4 - core index']
  #allocation1 [shape = 'u32[144,128]{1,0:T(1,128)}', space=vmem, size = 0x12000, scoped, tag = 'internal scratch']
  %s0 = inlined_call_operand.vmem [shape: f32[3], index: 0, kind: input, shape index: {}]
  %s1 = inlined_call_operand.vmem [shape: f32[2,16,8], index: 1, kind: input, shape index: {}]
  %s2 = inlined_call_operand.vmem [shape: f32[2,16,8], index: 2, kind: output, shape index: {}]
  %s3 = sld [smem:[#allocation0]]
  $region45: #{tpu_custom_call.1} parent=0
    _
  %s5 = ssub.s32 1, %s3
  %s6 = scalar_select 0, %s5, %s3
  $region1: #{tpu_custom_call.1} parent=0
    #allocation2 [shape = 'u8[512]{0}', space=smem, size = 0x200, scoped, tag = 'input window, operand 0, single buffered']
    #allocation3 [shape = 's32[2]{0}', space=sflag, size = 0x8, scoped, tag = 'scoped memory for tpu_custom_call.1']
    %7 = vsyncpa [#allocation3], 0
    loop: start=0, step=1, limit=4
    $region2: #{tpu_custom_call.1} parent=1 // loop_pre_header
      _
    $region3: #{tpu_custom_call.1} parent=1 // loop_header
      %s9 = sphi 0, %s13
      %p10 = scmp.ge.s32.totalorder %s9, 4
      %s17 = sphi 0, %s17
      %s19 = sphi 0, %s17
      %s20 = sphi 0, %s19
      %s34 = sphi 0, %s20
      %s40 = sphi 0, %s42
      %s43 = sphi 0, %s40
      %s44 = sphi 0, %s43
      %s60 = sphi 0, %s44
      %s66 = sphi 0, %s68
      %s69 = sphi 0, %s66
      %s70 = sphi 0, %s69
      %s86 = sphi 0, %s70
    $region4: #{tpu_custom_call.1} parent=1 // loop_header_branch
      %12 = sbr.rel (%p10) target = $region8
    $region5: #{tpu_custom_call.1} parent=1 // loop_body
      %s14 = ssub.s32 %s9, 1
      %s15 = ssub.s32 %s9, 2
      %s16 = sadd.s32 %s9, 1
      %s18 = sadd.s32 %s17, 1
      %p21 = scmp.eq.s32.totalorder %s9, 1
      %p22 = scmp.ne.s32.totalorder %s17, %s19
      %p23 = scmp.eq.s32.totalorder %s9, 0
      %p24 = por %p22, %p23
      %p25 = scmp.ne.s32.totalorder %s17, %s19
      %p26 = scmp.eq.s32.totalorder %s14, 1
      %p27 = por %p25, %p26
      %p28 = scmp.ne.s32.totalorder %s19, %s20
      %p29 = scmp.eq.s32.totalorder %s14, 0
      %p30 = por %p28, %p29
      %p31 = scmp.ne.s32.totalorder %s19, %s20
      %p32 = scmp.eq.s32.totalorder %s15, 1
      %p33 = por %p31, %p32
      %p35 = scmp.ne.s32.totalorder %s20, %s34
      %p36 = scmp.eq.s32.totalorder %s15, 0
      %p37 = por %p35, %p36
      %s38 = ssub.s32 %s9, %s16
      %p39 = scmp.eq.s32.totalorder %s38, 0
      %s41 = sadd.s32 %s40, 1
      %s42 = scalar_select %p39, %s40, %s41
      %p45 = pneg %p39
      %p46 = scmp.eq.s32.totalorder %s9, 1
      %p47 = por %p45, %p46
      %p48 = scmp.ne.s32.totalorder %s40, %s43
      %p49 = scmp.eq.s32.totalorder %s9, 0
      %p50 = por %p48, %p49
      %p51 = scmp.ne.s32.totalorder %s40, %s43
      %p52 = scmp.eq.s32.totalorder %s14, 1
      %p53 = por %p51, %p52
      %p54 = scmp.ne.s32.totalorder %s43, %s44
      %p55 = scmp.eq.s32.totalorder %s14, 0
      %p56 = por %p54, %p55
      %p57 = scmp.ne.s32.totalorder %s43, %s44
      %p58 = scmp.eq.s32.totalorder %s15, 1
      %p59 = por %p57, %p58
      %p61 = scmp.ne.s32.totalorder %s44, %s60
      %p62 = scmp.eq.s32.totalorder %s15, 0
      %p63 = por %p61, %p62
      %s64 = ssub.s32 %s9, %s16
      %p65 = scmp.eq.s32.totalorder %s64, 0
      %s67 = sadd.s32 %s66, 1
      %s68 = scalar_select %p65, %s66, %s67
      %p71 = pneg %p65
      %p72 = scmp.eq.s32.totalorder %s9, 1
      %p73 = por %p71, %p72
      %p74 = scmp.ne.s32.totalorder %s66, %s69
      %p75 = scmp.eq.s32.totalorder %s9, 0
      %p76 = por %p74, %p75
      %p77 = scmp.ne.s32.totalorder %s66, %s69
      %p78 = scmp.eq.s32.totalorder %s14, 1
      %p79 = por %p77, %p78
      %p80 = scmp.ne.s32.totalorder %s69, %s70
      %p81 = scmp.eq.s32.totalorder %s14, 0
      %p82 = por %p80, %p81
      %p83 = scmp.ne.s32.totalorder %s69, %s70
      %p84 = scmp.eq.s32.totalorder %s15, 1
      %p85 = por %p83, %p84
      %p87 = scmp.ne.s32.totalorder %s70, %s86
      %p88 = scmp.eq.s32.totalorder %s15, 0
      %p89 = por %p87, %p88
      %p90 = scmp.le.s32.totalorder 1, %s9
      %p91 = scmp.lt.s32.totalorder %s9, 3
      %p92 = pnand %p90, %p91
      %p93 = pneg %p92
      // Predicated region
      $region9: #{tpu_custom_call.1} parent=5 // pred_check
        _
      $region10: #{tpu_custom_call.1} parent=5 // pred_check_branch
        %95 = sbr.rel (%p92) target = $region12
      $region11: #{tpu_custom_call.1} parent=5 // pred_region
        %s96 = ssub.s32 %s9, 1
        // Predicated region
        $region13: #{tpu_custom_call.1} parent=11 // pred_check
          %p97 = pneg %p30
        $region14: #{tpu_custom_call.1} parent=11 // pred_check_branch
          %99 = sbr.rel (%p97) target = $region16
        $region15: #{tpu_custom_call.1} parent=11 // pred_region
          %s101 = ssub.s32 16, 16
          %102 = vsyncadd [#allocation3], %s101
          %s104 = sshll.u32 %s0, 4
          %s105 = int_to_ptr.vmem [resolvable:$true] %s104
          %107 = dma.vmem_to_smem %s105, 16, [#allocation2], [#allocation3]
        $region16: #{tpu_custom_call.1} parent=11 // pred_fallthru
          _
      $region12: #{tpu_custom_call.1} parent=5 // pred_fallthru
        _
      %p108 = scmp.lt.s32.totalorder %s9, 2
      // Predicated region
      $region17: #{tpu_custom_call.1} parent=5 // pred_check
        %p109 = pneg %p108
      $region18: #{tpu_custom_call.1} parent=5 // pred_check_branch
        %111 = sbr.rel (%p109) target = $region20
      $region19: #{tpu_custom_call.1} parent=5 // pred_region
        // Predicated region
        $region21: #{tpu_custom_call.1} parent=19 // pred_check
          %p112 = pneg %p50
        $region22: #{tpu_custom_call.1} parent=19 // pred_check_branch
          %114 = sbr.rel (%p112) target = $region24
        $region23: #{tpu_custom_call.1} parent=19 // pred_region
          %p115 = scmp.lt.s32.totalorder %s9, 1
          %s116 = scalar_select %p115, %s9, 1
          %s117 = smul.addr %s116, 2
          %s118 = smul.addr %s117, 8
          %s119 = scalar_lea.vmem %s1, %s118
        $region24: #{tpu_custom_call.1} parent=19 // pred_fallthru
          _
      $region20: #{tpu_custom_call.1} parent=5 // pred_fallthru
        _
      %p120 = scmp.le.s32.totalorder 1, %s9
      %p121 = scmp.lt.s32.totalorder %s9, 3
      %p122 = pnand %p120, %p121
      %p123 = pneg %p122
      // Predicated region
      $region25: #{tpu_custom_call.1} parent=5 // pred_check
        _
      $region26: #{tpu_custom_call.1} parent=5 // pred_check_branch
        %125 = sbr.rel (%p122) target = $region28
      $region27: #{tpu_custom_call.1} parent=5 // pred_region
        %s126 = ssub.s32 %s9, 1
        // Predicated region
        $region29: #{tpu_custom_call.1} parent=27 // pred_check
          %p127 = pneg %p30
        $region30: #{tpu_custom_call.1} parent=27 // pred_check_branch
          %129 = sbr.rel (%p127) target = $region32
        $region31: #{tpu_custom_call.1} parent=27 // pred_region
          %130 = dma.done [#allocation3], 16
        $region32: #{tpu_custom_call.1} parent=27 // pred_fallthru
          _
        %131 = sfence
        %p132 = pneg %p30
        %p133 = pneg %p27
        %p134 = scmp.lt.s32.totalorder %s14, 1
        %s135 = scalar_select %p134, %s14, 1
        %s136 = smul.addr %s135, 2
        %s137 = smul.addr %s136, 8
        %s138 = scalar_lea.vmem %s1, %s137
        %p139 = pneg %p56
        %p140 = pneg %p53
        %p141 = pneg %p82
        %p142 = pneg %p79
        %p143 = scmp.lt.s32.totalorder %s14, 1
        %s144 = scalar_select %p143, %s14, 1
        %s145 = smul.addr %s144, 2
        %s146 = smul.addr %s145, 8
        %s147 = scalar_lea.vmem %s2, %s146
        %p148 = scmp.lt.s32.totalorder %s14, 1
        %s149 = scalar_select %p148, %s14, 1
        %s150 = smul.addr %s149, 2
        %s151 = smul.addr %s150, 8
        %s152 = scalar_lea.vmem %s1, %s151
        %p153 = scmp.lt.s32.totalorder %s14, 1
        %s154 = scalar_select %p153, %s14, 1
        %s155 = smul.addr %s154, 2
        %s156 = smul.addr %s155, 8
        %s157 = scalar_lea.vmem %s2, %s156
        %v158 = vld [vmem:[%s152] sm:$0xff]
        %v159 = vld [vmem:[%s152 + $0x8] sm:$0xff]
        %vm160 = vcmask 64512
        %v161 = vsel %vm160, %v158, 0.0
        %162 = vadd.xlane.f32.xlu0 %v161
        %v163 = vpop.xlane.xlu0 %162
        %v164 = vsel %vm160, %v159, 0.0
        %165 = vadd.xlane.f32.xlu0 %v164
        %v166 = vpop.xlane.xlu0 %165
        %v167 = vrcp.pop 8.0
        %v168 = vmul.f32 %v163, %v167
        %v169 = vmul.f32 %v166, %v167
        %v170 = vlaneseq
        %v171 = vshrl.u32 %v170, 7
        %v172 = vadd.s32 %v171, 8
        %s173 = sld [smem:[#allocation2 + $0x1]]
        %v174 = vstv %s173
        %v175 = vmul.f32 %v174, %v168
        %v176 = vmul.f32 %v174, %v169
        %v177 = vrot.slane %v168, 7
        %v178 = vrot.slane %v169, 7
        %vm179 = vcmp.lt.s32.totalorder %v171, 1
        %v180 = vsel %vm179, %v177, %v178
        %v181 = vsel %vm179, %v178, %v177
        %v182 = vadd.s32 %v171, 4294967295
        %v183 = vadd.s32 %v172, 4294967295
        %vm184 = vcmp.ge.s32.totalorder %v182, 0
        %vm185 = vcmp.ge.s32.totalorder %v183, 0
        %vm186 = vcmp.lt.s32.totalorder %v182, 16
        %vm187 = vcmp.lt.s32.totalorder %v183, 16
        %vm188 = vmand %vm184, %vm186
        %vm189 = vmand %vm185, %vm187
        %s190 = sld [smem:[#allocation2]]
        %v191 = vsel %vm188, %v181, 0.0
        %v192 = vsel %vm189, %v180, 0.0
        %v193 = vstv %s190
        %v194 = vmul.f32 %v193, %v191
        %v195 = vmul.f32 %v193, %v192
        %v196 = vadd.f32 %v175, %v194
        %v197 = vadd.f32 %v176, %v195
        %v198 = vrot.slane %v168, 1
        %v199 = vrot.slane %v169, 1
        %vm200 = vcmp.lt.s32.totalorder %v171, 7
        %v201 = vsel %vm200, %v198, %v199
        %v202 = vsel %vm200, %v199, %v198
        %v203 = vadd.s32 %v171, 1
        %v204 = vadd.s32 %v172, 1
        %vm205 = vcmp.ge.s32.totalorder %v203, 0
        %vm206 = vcmp.ge.s32.totalorder %v204, 0
        %vm207 = vcmp.lt.s32.totalorder %v203, 16
        %vm208 = vcmp.lt.s32.totalorder %v204, 16
        %vm209 = vmand %vm205, %vm207
        %vm210 = vmand %vm206, %vm208
        %s211 = sld [smem:[#allocation2 + $0x2]]
        %v212 = vsel %vm209, %v201, 0.0
        %v213 = vsel %vm210, %v202, 0.0
        %v214 = vstv %s211
        %v215 = vmul.f32 %v214, %v212
        %v216 = vmul.f32 %v214, %v213
        %v217 = vadd.f32 %v196, %v215
        %v218 = vadd.f32 %v197, %v216
        %v219 = vxor.u32 %v217, 2147483648
        %v220 = vxor.u32 %v218, 2147483648
        %v221 = vmul.f32 %v219, 1.442695
        %v222 = vpow.pop %v221
        %v223 = vmul.f32 %v220, 1.442695
        %v224 = vpow.pop %v223
        %v225 = vadd.f32 %v222, 1.0
        %v226 = vadd.f32 %v224, 1.0
        %v227 = vrcp.pop %v225
        %v228 = vmul.f32 1.0, %v227
        %v229 = vrcp.pop %v226
        %v230 = vmul.f32 1.0, %v229
        %232 = vset.pattern.permute.xlu0 0
        %233 = vperm.xlu0 %232, %v228
        %v234 = vpop.permute.xlu0 %233
        %237 = vset.pattern.permute.xlu0 0
        %238 = vperm.xlu0 %237, %v230
        %v239 = vpop.permute.xlu0 %238
        %v241 = vmul.f32 %v158, %v234
        %v242 = vmul.f32 %v159, %v239
        %243 = vst.msk [vmem:[%s157] sm:$0xff] %vm160, %v241
        %244 = vst.msk [vmem:[%s157 + $0x8] sm:$0xff] %vm160, %v242
        %p245 = scmp.lt.s32.totalorder %s14, 1
        %s246 = scalar_select %p245, %s14, 1
        %s247 = smul.addr %s246, 2
        %s248 = smul.addr %s247, 8
        %s249 = scalar_lea.vmem %s2, %s248
        // Predicated region
        $region33: #{tpu_custom_call.1} parent=27 // pred_check
          %p250 = pneg %p79
        $region34: #{tpu_custom_call.1} parent=27 // pred_check_branch
          %252 = sbr.rel (%p250) target = $region36
        $region35: #{tpu_custom_call.1} parent=27 // pred_region
          _
        $region36: #{tpu_custom_call.1} parent=27 // pred_fallthru
          _
      $region28: #{tpu_custom_call.1} parent=5 // pred_fallthru
        _
      %p253 = scmp.le.s32.totalorder 2, %s9
      // Predicated region
      $region37: #{tpu_custom_call.1} parent=5 // pred_check
        %p254 = pneg %p253
      $region38: #{tpu_custom_call.1} parent=5 // pred_check_branch
        %256 = sbr.rel (%p254) target = $region40
      $region39: #{tpu_custom_call.1} parent=5 // pred_region
        %s257 = ssub.s32 %s9, 2
        // Predicated region
        $region41: #{tpu_custom_call.1} parent=39 // pred_check
          %p258 = pneg %p85
        $region42: #{tpu_custom_call.1} parent=39 // pred_check_branch
          %260 = sbr.rel (%p258) target = $region44
        $region43: #{tpu_custom_call.1} parent=39 // pred_region
          %p261 = scmp.lt.s32.totalorder %s15, 1
          %s262 = scalar_select %p261, %s15, 1
          %s263 = smul.addr %s262, 2
          %s264 = smul.addr %s263, 8
          %s265 = scalar_lea.vmem %s2, %s264
        $region44: #{tpu_custom_call.1} parent=39 // pred_fallthru
          _
      $region40: #{tpu_custom_call.1} parent=5 // pred_fallthru
        _
    $region6: #{tpu_custom_call.1} parent=1 // loop_footer
      %s13 = sadd.s32 1, %s9
    $region7: #{tpu_custom_call.1} parent=1 // loop_footer_branch
      %8 = sbr.rel target = $region3
    $region8: #{tpu_custom_call.1} parent=1 // loop_exit
      _
    %266 = vsyncpa [#allocation3], 1
    %s267 = scalar_lea.sflag [#allocation3], 1
    %268 = vsyncpa %s267, 1

</llo_original>
